<compile_context>
chip_gen: v7x
topology: tpu7x:2x2x1
jax: 0.10.0
libtpu: 0.0.40
codegen_flags: <defaults>
</compile_context>

<pallas_src>
import math

import jax
import jax.numpy as jnp
from jax.experimental import pallas as pl
from jax.experimental.pallas import tpu as pltpu


_LANE = 128          # TPU lane width (fast axis)
_MiB = 1024 * 1024


def _round_up(v, m):
    return ((v + m - 1) // m) * m


def _round_down_min(v, m):
    return max(m, (v // m) * m)


def _hw_config():
    """(target_block_bytes, vmem_limit_bytes) per TPU generation."""
    try:
        kind = jax.devices()[0].device_kind.lower()
    except Exception:
        kind = ""
    if "7" in kind:
        # v7x: ~3.2 TB/s per TC -> amortize the ~0.35us/step overhead with
        # bigger blocks; 64 MiB physical VMEM per TC caps the limit.
        return 6 * _MiB, 48 * _MiB
    if "v6" in kind or "6e" in kind:
        # v6e: ~4 MiB blocks; 128 MiB physical VMEM -> ample headroom.
        return 4 * _MiB, 64 * _MiB
    # v5e / v5p / v4 / unknown: 2 MiB blocks already <10% step overhead; keep
    # the explicit vmem override (v5e default scoped VMEM is only 16 MiB).
    return 2 * _MiB, 32 * _MiB


def _dot_product_kernel(coffs_ref, x_ref, o_ref):
    # Single VPU multiply (with optional widening cast); the kernel is
    # HBM-DMA bound on every generation.
    o_ref[...] = x_ref[...].astype(o_ref.dtype) * coffs_ref[...]


def _forward_2d(coffs, x2d, out_dtype, block_bytes, vmem_limit):
    """Lane-dense 2-D path (C % 128 == 0) and masked fallback for huge odd C."""
    N, C = x2d.shape
    itemsize = max(jnp.dtype(x2d.dtype).itemsize, jnp.dtype(out_dtype).itemsize)
    packing = max(1, 4 // jnp.dtype(x2d.dtype).itemsize)
    sub = 8 * packing                       # dtype-aware sublane rounding
    row_bytes = C * itemsize
    coffs2d = coffs.reshape(1, C).astype(out_dtype)

    if row_bytes > block_bytes:
        # Very wide channel axis: tile channels too.  Channel axis is the OUTER
        # grid axis so the (1, col_tile) coefficient stripe is DMA'd once per
        # column stripe, not once per step.
        row_tile = min(_round_up(N, sub), 8 * sub)          # ~64 rows (f32)
        col_tile = _round_down_min(block_bytes // (row_tile * itemsize), _LANE)
        col_tile = min(col_tile, _round_up(C, _LANE))
        grid = (pl.cdiv(C, col_tile), pl.cdiv(N, row_tile))
        in_specs = [
            pl.BlockSpec((1, col_tile), lambda j, i: (0, j)),
            pl.BlockSpec((row_tile, col_tile), lambda j, i: (i, j)),
        ]
        out_spec = pl.BlockSpec((row_tile, col_tile), lambda j, i: (i, j))
    else:
        # Common case: whole channel axis in one lane-dense block; the grid has
        # >= 2 steps whenever the input exceeds one block, so v7x can shard
        # across both TensorCores.
        col_tile = C
        rows_wanted = max(sub, block_bytes // row_bytes)
        row_tile = _round_down_min(rows_wanted, sub)
        row_tile = min(row_tile, _round_up(max(N, 1), sub))
        grid = (pl.cdiv(N, row_tile),)
        in_specs = [
            pl.BlockSpec((1, col_tile), lambda i: (0, 0)),      # resident
            pl.BlockSpec((row_tile, col_tile), lambda i: (i, 0)),
        ]
        out_spec = pl.BlockSpec((row_tile, col_tile), lambda i: (i, 0))

    return pl.pallas_call(
        _dot_product_kernel,
        out_shape=jax.ShapeDtypeStruct((N, C), out_dtype),
        grid_spec=pltpu.PrefetchScalarGridSpec(
            num_scalar_prefetch=0,
            grid=grid,
            in_specs=in_specs,
            out_specs=out_spec,
        ),
        compiler_params=pltpu.CompilerParams(
            dimension_semantics=("parallel",) * len(grid),
            vmem_limit_bytes=vmem_limit,
        ),
    )(coffs2d, x2d)


def _forward_flat(coffs, x, out_dtype, block_bytes, vmem_limit):
    """Lane-dense flattened path for C % 128 != 0.

    Blocks are multiples of L = lcm(C, 128), so every block starts at channel 0
    and lines up with a pre-tiled coefficient row; apart from the final masked
    tail, all stores are full-lane and the HBM writeback DMA stays contiguous.
    """
    C = coffs.size
    total = x.size
    itemsize = max(jnp.dtype(x.dtype).itemsize, jnp.dtype(out_dtype).itemsize)
    L = math.lcm(C, _LANE)

    block_elems = max(L, (block_bytes // itemsize) // L * L)
    block_elems = min(block_elems, _round_up(total, L))

    coffs_tiled = jnp.tile(coffs.reshape(-1).astype(out_dtype), block_elems // C)
    x_flat = x.reshape(total)
    grid = (pl.cdiv(total, block_elems),)

    out = pl.pallas_call(
        _dot_product_kernel,
        out_shape=jax.ShapeDtypeStruct((total,), out_dtype),
        grid_spec=pltpu.PrefetchScalarGridSpec(
            num_scalar_prefetch=0,
            grid=grid,
            in_specs=[
                pl.BlockSpec((block_elems,), lambda i: (0,)),   # resident row
                pl.BlockSpec((block_elems,), lambda i: (i,)),
            ],
            out_specs=pl.BlockSpec((block_elems,), lambda i: (i,)),
        ),
        compiler_params=pltpu.CompilerParams(
            dimension_semantics=("parallel",),
            vmem_limit_bytes=vmem_limit,
        ),
    )(coffs_tiled, x_flat)
    return out.reshape(x.shape)


@jax.jit
def dot_product_forward(coffs, x):
    """coffs: (1, C); x: (*, C) -> (*, C) in promote_types(coffs, x) dtype."""
    orig_shape = x.shape
    C = orig_shape[-1]
    N = math.prod(orig_shape[:-1]) if len(orig_shape) > 1 else 1
    out_dtype = jnp.promote_types(x.dtype, coffs.dtype)
    block_bytes, vmem_limit = _hw_config()
    itemsize = max(jnp.dtype(x.dtype).itemsize, jnp.dtype(out_dtype).itemsize)
    L = math.lcm(C, _LANE)

    if C % _LANE != 0 and L * itemsize <= block_bytes:
        # Non-lane-aligned channels: use the flattened lane-dense path.
        return _forward_flat(coffs, x, out_dtype, block_bytes, vmem_limit)

    # C % 128 == 0 (natively lane-dense), or lcm(C, 128) would not fit in one
    # block (pathologically large non-aligned C) -> 2-D path (the latter keeps
    # masked tail stores, which is unavoidable without padding copies).
    out = _forward_2d(coffs, x.reshape(N, C), out_dtype, block_bytes, vmem_limit)
    return out.reshape(orig_shape)


def glorot_init(key, shape):
    """torch_geometric-style glorot: U(-a, a) with a = sqrt(6/(fan_in+fan_out))."""
    fan_in, fan_out = shape[-2], shape[-1]
    a = math.sqrt(6.0 / (fan_in + fan_out))
    return jax.random.uniform(key, shape, minval=-a, maxval=a, dtype=jnp.float32)


if __name__ == "__main__":
    key = jax.random.PRNGKey(0)
    k1, k2, k3, k4, k5 = jax.random.split(key, 5)

    # Case 1: lane-aligned channels -> 2-D lane-dense path.
    channels = 128
    coffs = glorot_init(k1, (1, channels))
    x = jax.random.normal(k2, (2, 8, channels), dtype=jnp.float32)
    out = jax.block_until_ready(dot_product_forward(coffs, x))
    ref = coffs.reshape(1, 1, channels) * x
    assert out.shape == x.shape and out.dtype == ref.dtype
    assert jnp.allclose(out, ref, atol=1e-6, rtol=1e-6)

    # Case 2: C not a multiple of 128 and N not a multiple of 8 -> flattened
    # lane-dense path (L = lcm(96, 128) = 384; only the final tail is masked).
    channels2 = 96
    coffs2 = glorot_init(k3, (1, channels2))
    x2 = jax.random.normal(k4, (3, 5, channels2), dtype=jnp.float32)
    out2 = jax.block_until_ready(dot_product_forward(coffs2, x2))
    ref2 = coffs2.reshape(1, 1, channels2) * x2
    assert out2.shape == x2.shape
    assert jnp.allclose(out2, ref2, atol=1e-6, rtol=1e-6)

    # Case 3: bf16 activations with f32 coefficients -> PyTorch-style promotion
    # (multiply computed in f32, f32 output), dtype-aware sublane rounding.
    x3 = jax.random.normal(k5, (4, 16, channels), dtype=jnp.bfloat16)
    out3 = jax.block_until_ready(dot_product_forward(coffs, x3))
    ref3 = coffs.reshape(1, 1, channels) * x3.astype(jnp.float32)
    assert out3.shape == x3.shape and out3.dtype == jnp.float32
    assert jnp.allclose(out3, ref3, atol=1e-6, rtol=1e-6)

    print("KERNEL_OK")
</pallas_src>

<mosaic_0001>
module attributes {stable_mosaic.version = 11 : i64} {
  func.func @_dot_product_kernel(%arg0: i32, %arg1: memref<1x128xf32, #tpu.memory_space<vmem>>, %arg2: memref<16x128xf32, #tpu.memory_space<vmem>>, %arg3: memref<16x128xf32, #tpu.memory_space<vmem>>) attributes {dimension_semantics = [#tpu.dimension_semantics<parallel>], iteration_bounds = array<i64: 1>, scalar_prefetch = 0 : i64, scratch_operands = 0 : i64, tpu.core_type = #tpu.core_type<tc>, window_params = [{pipeline_mode = #tpu.pipeline_mode<synchronous>, transform_indices = @transform_0, window_bounds = array<i64: 1, 128>}, {transform_indices = @transform_1, window_bounds = array<i64: 16, 128>}, {transform_indices = @transform_2, window_bounds = array<i64: 16, 128>}]} {
    %c0 = arith.constant 0 : index
    %c0_0 = arith.constant 0 : index
    %0 = vector.load %arg2[%c0, %c0_0] : memref<16x128xf32, #tpu.memory_space<vmem>>, vector<16x128xf32>
    %c0_1 = arith.constant 0 : index
    %c0_2 = arith.constant 0 : index
    %1 = vector.load %arg1[%c0_1, %c0_2] : memref<1x128xf32, #tpu.memory_space<vmem>>, vector<1x128xf32>
    %2 = vector.broadcast %1 : vector<1x128xf32> to vector<16x128xf32>
    %3 = arith.mulf %0, %2 : vector<16x128xf32>
    %c0_3 = arith.constant 0 : index
    %c0_4 = arith.constant 0 : index
    %4 = vector.load %arg3[%c0_3, %c0_4] : memref<16x128xf32, #tpu.memory_space<vmem>>, vector<16x128xf32>
    tpu.vector_store %arg3[%c0_3, %c0_4], %3 {strides = array<i32>} : memref<16x128xf32, #tpu.memory_space<vmem>>, vector<16x128xf32>,
    return
  }
  func.func @transform_0(%arg0: i32) -> (i32, i32) {
    %c0_i32 = arith.constant 0 : i32
    %c0_i32_0 = arith.constant 0 : i32
    %c0_i32_1 = arith.constant 0 : i32
    return %c0_i32, %c0_i32_0 : i32, i32
  }
  func.func @transform_1(%arg0: i32) -> (i32, i32) {
    %c0_i32 = arith.constant 0 : i32
    %c0_i32_0 = arith.constant 0 : i32
    return %arg0, %c0_i32 : i32, i32
  }
  func.func @transform_2(%arg0: i32) -> (i32, i32) {
    %c0_i32 = arith.constant 0 : i32
    %c0_i32_0 = arith.constant 0 : i32
    return %arg0, %c0_i32 : i32, i32
  }
}

</mosaic_0001>

<llo_original>
// kernel: dot_product_forward.1
$region0: #{dot_product_forward.1}
  #allocation0 [shape = 'u32[]', space=smem, size = 0x4, offset = 0x4, fixed_abs, tag = 'smem constant byte address 0x4 - core index']
  #allocation1 [shape = 'u32[144,128]{1,0:T(1,128)}', space=vmem, size = 0x12000, scoped, tag = 'internal scratch']
  %s0 = inlined_call_operand.vmem [shape: f32[1,128], index: 0, kind: input, shape index: {}]
  %s1 = inlined_call_operand.hbm [shape: f32[16,128], index: 1, kind: input, shape index: {}]
  %s2 = inlined_call_operand.hbm [shape: f32[16,128], index: 2, kind: output, shape index: {}]
  %s3 = sld [smem:[#allocation0]]
  $region22: #{dot_product_forward.1} parent=0
    _
  %s5 = ssub.s32 1, %s3
  %s6 = scalar_select 0, %s5, %s3
  $region1: #{dot_product_forward.1} parent=0
    #allocation2 [shape = 'u8[8192]{0}', space=vmem, size = 0x2000, scoped, tag = 'input window, operand 1, single buffered']
    #allocation3 [shape = 's32[1]{0}', space=sflag, size = 0x4, scoped, tag = 'scoped memory for dot_product_forward.1']
    #allocation4 [shape = 's32[1]{0}', space=sflag, size = 0x4, scoped, tag = 'scoped memory for dot_product_forward.1']
    #allocation5 [shape = 'u8[8192]{0}', space=vmem, size = 0x2000, scoped, tag = 'output window, operand 0, single buffered']
    %7 = vsyncpa [#allocation3], 0
    %8 = vsyncpa [#allocation4], 0
    // Predicated region
    $region2: #{dot_product_forward.1} parent=1 // pred_check
      _
    $region3: #{dot_product_forward.1} parent=1 // pred_check_branch
      %10 = sbr.rel (0) target = $region5
    $region4: #{dot_product_forward.1} parent=1 // pred_region
      _
    $region5: #{dot_product_forward.1} parent=1 // pred_fallthru
      _
    // Predicated region
    $region6: #{dot_product_forward.1} parent=1 // pred_check
      _
    $region7: #{dot_product_forward.1} parent=1 // pred_check_branch
      %12 = sbr.rel (0) target = $region9
    $region8: #{dot_product_forward.1} parent=1 // pred_region
      %s14 = ssub.s32 256, 256
      %15 = vsyncadd [#allocation3], %s14
      %s16 = sshll.u32 [#allocation2], 4
      %s17 = int_to_ptr.vmem [resolvable:$true] %s16
      %22 = dma.hbm_to_vmem [thread:$0]  %s1, 256, %s17, [#allocation3], 128, 128, 8
    $region9: #{dot_product_forward.1} parent=1 // pred_fallthru
      _
    // Predicated region
    $region10: #{dot_product_forward.1} parent=1 // pred_check
      _
    $region11: #{dot_product_forward.1} parent=1 // pred_check_branch
      %24 = sbr.rel (0) target = $region13
    $region12: #{dot_product_forward.1} parent=1 // pred_region
      %25 = dma.done [#allocation3], 256
    $region13: #{dot_product_forward.1} parent=1 // pred_fallthru
      _
    %v26 = vld [vmem:[#allocation2] sm:$0xff]
    %v27 = vld [vmem:[#allocation2 + $0x8] sm:$0xff]
    %v28 = vld [vmem:[%s0] sm:$0x1]
    %v30 = vlaneseq
    %v31 = vshrl.u32 %v30, 7
    %v32 = vsub.s32 0, %v31
    %v33 = vrot.slane %v28, %v32
    %v35 = vmul.f32 %v26, %v33
    %v36 = vmul.f32 %v27, %v33
    %37 = vst [vmem:[#allocation5] sm:$0xff] %v35
    %38 = vst [vmem:[#allocation5 + $0x8] sm:$0xff] %v36
    // Predicated region
    $region14: #{dot_product_forward.1} parent=1 // pred_check
      _
    $region15: #{dot_product_forward.1} parent=1 // pred_check_branch
      %40 = sbr.rel (0) target = $region17
    $region16: #{dot_product_forward.1} parent=1 // pred_region
      %s42 = ssub.s32 256, 256
      %43 = vsyncadd [#allocation4], %s42
      %s44 = sshll.u32 [#allocation5], 4
      %s45 = int_to_ptr.vmem [resolvable:$true] %s44
      %50 = dma.vmem_to_hbm [thread:$0]  %s45, 256, %s2, [#allocation4], 128, 128, 8
    $region17: #{dot_product_forward.1} parent=1 // pred_fallthru
      _
    // Predicated region
    $region18: #{dot_product_forward.1} parent=1 // pred_check
      _
    $region19: #{dot_product_forward.1} parent=1 // pred_check_branch
      %52 = sbr.rel (0) target = $region21
    $region20: #{dot_product_forward.1} parent=1 // pred_region
      %53 = dma.done [#allocation4], 256
    $region21: #{dot_product_forward.1} parent=1 // pred_fallthru
      _
    %54 = vsyncpa [#allocation3], 1
    %55 = vsyncpa [#allocation4], 1

</llo_original>
